<compile_context>
chip_gen: v7x
topology: tpu7x:2x2x1
jax: 0.10.0
libtpu: 0.0.40
codegen_flags: <defaults>
</compile_context>

<pallas_src>
import functools
import math

import jax
import jax.numpy as jnp
from jax.experimental import pallas as pl
from jax.experimental.pallas import tpu as pltpu


def _round_up(x, m):
    return (x + m - 1) // m * m


def _sepconv_kernel(x_hbm, dw_ref, pw_ref, o_ref, xs_ref, dma_sem, *,
                    w, kh, kw, pad, dil, hw, rw, delta, place, win_len,
                    nstrips, b_tile, use_mxu, mxu_dtype):
    """One (batch-block, output-row-strip) grid step.

    x_hbm  : (N, Cin, H*W) raw HBM ref (memory_space=ANY)
    dw_ref : (Cin, KH*KW)  depthwise taps (VMEM)
    pw_ref : (Cout, Cin)   pointwise weights (VMEM)
    o_ref  : (b_tile, Cout, rw) lane-dense output strip
    xs_ref : (b_tile, Cin, spad) zero-padded flattened image scratch in the
             input dtype; built at strip 0 of each batch block, reused for the
             remaining strips of that block.
    dma_sem: (b_tile,) DMA completion semaphores.
    """
    cin = xs_ref.shape[1]
    cout = pw_ref.shape[0]
    spad = xs_ref.shape[2]
    bb = pl.program_id(0)
    s = pl.program_id(1)
    tail = spad - (place + hw)

    # ---- strip 0: stage image(s) HBM -> padded scratch, exactly once -------
    @pl.when(s == 0)
    def _():
        # Kick off the interior copies first so the (small) pad zero-fill
        # overlaps with the DMA; pads and interior are disjoint regions.
        for bl in range(b_tile):
            pltpu.make_async_copy(
                x_hbm.at[bb * b_tile + bl],
                xs_ref.at[bl, :, pl.ds(place, hw)],
                dma_sem.at[bl]).start()
        # Zero only the padding lead/tail; the interior is written by the DMA.
        if place > 0:
            xs_ref[:, :, :place] = jnp.zeros((b_tile, cin, place), xs_ref.dtype)
        if tail > 0:
            xs_ref[:, :, place + hw:] = jnp.zeros((b_tile, cin, tail), xs_ref.dtype)
        for bl in range(b_tile):
            pltpu.make_async_copy(
                x_hbm.at[bb * b_tile + bl],
                xs_ref.at[bl, :, pl.ds(place, hw)],
                dma_sem.at[bl]).wait()
        # TODO(synk): prefetch the next batch block's images here (gated on
        # the last strip) once the batch axis no longer needs to be megacore
        # "parallel"-safe.

    dw = dw_ref[...].astype(jnp.float32)                 # (Cin, KH*KW)
    pw = pw_ref[...].astype(jnp.float32)                 # (Cout, Cin)

    # Boundary-column masks, hoisted out of the tap loops: at most kw-1
    # distinct nonzero column offsets, each reused across all kh tap rows.
    col = jax.lax.broadcasted_iota(jnp.int32, (1, rw), 1) % w
    col_masks = {}
    for j in range(kw):
        dj = j * dil - pad
        if dj != 0 and dj not in col_masks:
            cj = col + dj
            col_masks[dj] = jnp.broadcast_to((cj >= 0) & (cj < w), (cin, rw))

    if nstrips == 1:
        p0 = 0
    else:
        p0 = pl.multiple_of(s * rw, 128)                 # rw is 128-aligned here

    for bl in range(b_tile):
        # Window of the scratch covering every tap of this strip's rows.
        win = xs_ref[bl, :, pl.ds(p0, win_len)]          # (Cin, win_len)

        # Depthwise accumulation: each tap is a static lane shift of the
        # flattened window + one f32 VPU multiply-accumulate.  Row padding
        # falls out of the zero lead/tail of the scratch; taps that wrap
        # across rows at the left/right image border are masked.
        acc = jnp.zeros((cin, rw), jnp.float32)
        for i in range(kh):
            for j in range(kw):
                off = delta + (i * w + j) * dil
                tap = win[:, off:off + rw]               # (Cin, rw) lane shift
                dj = j * dil - pad
                if dj != 0:
                    tap = jnp.where(col_masks[dj], tap, 0)
                t = i * kw + j
                acc = acc + dw[:, t:t + 1] * tap

        # Pointwise 1x1 conv == channel contraction on lane-flat activations.
        if use_mxu:
            out = jnp.dot(pw.astype(mxu_dtype), acc.astype(mxu_dtype),
                          preferred_element_type=jnp.float32)
        else:
            # Tiny Cin*Cout: a few VPU broadcast-MACs beat MXU push/pop latency.
            out = jnp.zeros((cout, rw), jnp.float32)
            for c in range(cin):
                out = out + pw[:, c:c + 1] * acc[c:c + 1, :]

        o_ref[bl] = out.astype(o_ref.dtype)


def separable_conv2d(x, dw_weight, pw_weight, *, padding=0, dilation=1,
                     lane_target=2048):
    """Equivalent to SeparableConv2d.forward with stride=1, bias=False.

    x        : (N, Cin, H, W)
    dw_weight: (Cin, KH, KW)   -- PyTorch conv1.weight (Cin, 1, KH, KW) squeezed
    pw_weight: (Cout, Cin)     -- PyTorch pointwise.weight (Cout, Cin, 1, 1) squeezed
    returns  : (N, Cout, OH, OW)
    """
    n, cin, h, w = x.shape
    cin_w, kh, kw = dw_weight.shape
    assert cin_w == cin
    cout, cin_p = pw_weight.shape
    assert cin_p == cin

    oh = h + 2 * padding - dilation * (kh - 1)
    ow = w + 2 * padding - dilation * (kw - 1)
    # TODO(synk): stride > 1, bias=True and padding wider than 'same' are not
    # implemented; the module defaults (stride=1, bias=False) are covered.
    if oh > h or ow > w or oh <= 0 or ow <= 0:
        raise NotImplementedError("only stride=1 convs with output <= input size")

    # Lane-dense working layout: flatten spatial onto the 128-lane axis.
    x_flat = x.reshape(n, cin, h * w)
    dw_flat = dw_weight.reshape(cin, kh * kw)
    hw = h * w

    # Output row-strip tiling (grid axis 1): ~lane_target lane elements per
    # strip, with a 128-aligned strip extent so output stores stay unmasked.
    rows = min(oh, max(1, pl.cdiv(lane_target, w)))
    if rows < oh:
        g = 128 // math.gcd(128, w)
        rows = min(oh, _round_up(rows, g))
    nstrips = pl.cdiv(oh, rows)
    rw = rows * w

    # Batch tiling (grid axis 0): tiny images that fit in one strip get
    # several images per grid step so the kernel is not step-overhead bound.
    if nstrips == 1:
        want = max(1, min(lane_target // max(rw, 1), 8))
        b_tile = 1
        for d in range(1, n + 1):
            if n % d == 0 and d <= want:
                b_tile = d
    else:
        b_tile = 1
    nb = n // b_tile

    # Padded-scratch geometry (all static).
    lead = padding * w + padding             # flat offset of pixel (0,0) in padded image
    delta = _round_up(lead, 128) - lead      # extra shift so the interior DMA lands 128-aligned
    place = lead + delta
    halo = dilation * (kh - 1) * w + dilation * (kw - 1)
    win_len = _round_up(rw + halo + delta, 128)
    spad = max(_round_up((nstrips - 1) * rw + win_len, 128),
               _round_up(place + hw, 128))

    # MXU only pays off when both the contraction and output-channel dims have
    # substance; operands drop to bf16 only when x itself is 16-bit.
    use_mxu = (cin >= 16 and cout >= 8) or (cin * cout >= 256)
    mxu_dtype = (jnp.bfloat16 if x.dtype in (jnp.bfloat16, jnp.float16)
                 else jnp.float32)

    kernel = functools.partial(
        _sepconv_kernel, w=w, kh=kh, kw=kw, pad=padding, dil=dilation, hw=hw,
        rw=rw, delta=delta, place=place, win_len=win_len, nstrips=nstrips,
        b_tile=b_tile, use_mxu=use_mxu, mxu_dtype=mxu_dtype)

    # Advisory scheduling hints + Mosaic VMEM budget (headroom but no 32 MiB
    # floor; capped at 48 MiB to stay inside a v7x TensorCore's 64 MiB).
    xi = jnp.dtype(x.dtype).itemsize
    flops = 2 * n * oh * ow * cin * (kh * kw + cout)
    bytes_accessed = (x.size * xi
                      + dw_weight.size * jnp.dtype(dw_weight.dtype).itemsize
                      + pw_weight.size * jnp.dtype(pw_weight.dtype).itemsize
                      + n * cout * oh * w * xi)
    vmem_need = (b_tile * cin * spad * xi                 # padded-image scratch
                 + 2 * b_tile * cout * rw * xi            # double-buffered out block
                 + 2 * (cin * kh * kw + cout * cin) * 4   # weight blocks
                 + (2 << 20))                             # working-set slack
    vmem_limit = int(min(max(2 * vmem_need, 8 << 20), 48 << 20))

    # TODO(synk): for very large Cin at big images add a channel grid axis
    # (depthwise is channel-independent) and/or the fold-dw-into-pw im2col MXU
    # variant; not needed for the small-channel configs exercised here.
    out_flat = pl.pallas_call(
        kernel,
        out_shape=jax.ShapeDtypeStruct((n, cout, oh * w), x.dtype),
        grid_spec=pltpu.PrefetchScalarGridSpec(
            num_scalar_prefetch=0,
            grid=(nb, nstrips),
            in_specs=[
                pl.BlockSpec(memory_space=pl.ANY),                  # x stays in HBM
                pl.BlockSpec((cin, kh * kw), lambda bb, s: (0, 0)),
                pl.BlockSpec((cout, cin), lambda bb, s: (0, 0)),
            ],
            out_specs=pl.BlockSpec((b_tile, cout, rw), lambda bb, s: (bb, 0, s)),
            scratch_shapes=[
                pltpu.VMEM((b_tile, cin, spad), x.dtype),
                pltpu.SemaphoreType.DMA((b_tile,)),
            ]),
        compiler_params=pltpu.CompilerParams(
            dimension_semantics=("parallel", "arbitrary"),
            vmem_limit_bytes=vmem_limit,
        ),
        cost_estimate=pl.CostEstimate(
            flops=int(flops), transcendentals=0,
            bytes_accessed=int(bytes_accessed)),
    )(x_flat, dw_flat, pw_weight)

    out = out_flat.reshape(n, cout, oh, w)     # free reshape back to NCHW
    if ow != w:
        out = out[..., :ow]                    # drop padded-out columns
    return out


def _reference(x, dw_weight, pw_weight, *, padding, dilation):
    """Pure-JAX reference using lax.conv_general_dilated (matches PyTorch conv)."""
    cin = x.shape[1]
    y = jax.lax.conv_general_dilated(
        x,
        dw_weight[:, None, :, :],
        window_strides=(1, 1),
        padding=((padding, padding), (padding, padding)),
        rhs_dilation=(dilation, dilation),
        dimension_numbers=("NCHW", "OIHW", "NCHW"),
        feature_group_count=cin,
    )
    return jax.lax.conv_general_dilated(
        y,
        pw_weight[:, :, None, None],
        window_strides=(1, 1),
        padding=((0, 0), (0, 0)),
        dimension_numbers=("NCHW", "OIHW", "NCHW"),
    )


if __name__ == "__main__":
    key = jax.random.PRNGKey(0)

    # Primary config: SeparableConv2d(in_channels=4, out_channels=8,
    #                                 kernel_size=3, stride=1, padding=1,
    #                                 dilation=1, bias=False)
    N, CIN, COUT, H, W, K, PAD, DIL = 2, 4, 8, 16, 16, 3, 1, 1
    kx, kdw, kpw = jax.random.split(key, 3)
    x = jax.random.normal(kx, (N, CIN, H, W), dtype=jnp.float32)
    dw_weight = jax.random.normal(kdw, (CIN, K, K), dtype=jnp.float32) * 0.1
    pw_weight = jax.random.normal(kpw, (COUT, CIN), dtype=jnp.float32) * 0.1

    out = separable_conv2d(x, dw_weight, pw_weight, padding=PAD, dilation=DIL)
    out = jax.block_until_ready(out)
    ref = _reference(x, dw_weight, pw_weight, padding=PAD, dilation=DIL)
    assert out.shape == (N, COUT, H, W), out.shape
    err = float(jnp.max(jnp.abs(out - ref)))
    assert jnp.allclose(out, ref, atol=1e-4, rtol=1e-4), err

    # Secondary config: exercises multi-strip tiling with a partial last strip
    # (oh % rows != 0), the per-batch scratch reuse across strips, and odd
    # channel counts.
    N2, CIN2, COUT2, H2, W2 = 1, 6, 5, 48, 32
    k2 = jax.random.split(key, 6)
    x2 = jax.random.normal(k2[3], (N2, CIN2, H2, W2), dtype=jnp.float32)
    dw2 = jax.random.normal(k2[4], (CIN2, K, K), dtype=jnp.float32) * 0.1
    pw2 = jax.random.normal(k2[5], (COUT2, CIN2), dtype=jnp.float32) * 0.1
    out2 = separable_conv2d(x2, dw2, pw2, padding=1, dilation=1, lane_target=640)
    out2 = jax.block_until_ready(out2)
    ref2 = _reference(x2, dw2, pw2, padding=1, dilation=1)
    assert out2.shape == (N2, COUT2, H2, W2), out2.shape
    err2 = float(jnp.max(jnp.abs(out2 - ref2)))
    assert jnp.allclose(out2, ref2, atol=1e-4, rtol=1e-4), err2

    print("KERNEL_OK")
</pallas_src>

<mosaic_0001>
module attributes {stable_mosaic.version = 11 : i64} {
  func.func @_sepconv_kernel(%arg0: i32, %arg1: i32, %arg2: memref<2x4x256xf32, #tpu.memory_space<any>>, %arg3: memref<4x9xf32, #tpu.memory_space<vmem>>, %arg4: memref<8x4xf32, #tpu.memory_space<vmem>>, %arg5: memref<2x8x256xf32, #tpu.memory_space<vmem>>, %arg6: memref<2x4x512xf32, #tpu.memory_space<vmem>>, %arg7: memref<2x!tpu.dma_semaphore, #tpu.memory_space<semaphore_mem>>) attributes {dimension_semantics = [#tpu.dimension_semantics<parallel>, #tpu.dimension_semantics<arbitrary>], iteration_bounds = array<i64: 1, 1>, scalar_prefetch = 0 : i64, scratch_operands = 2 : i64, tpu.core_type = #tpu.core_type<tc>, window_params = [{}, {pipeline_mode = #tpu.pipeline_mode<synchronous>, transform_indices = @transform_1, window_bounds = array<i64: 4, 9>}, {pipeline_mode = #tpu.pipeline_mode<synchronous>, transform_indices = @transform_2, window_bounds = array<i64: 8, 4>}, {transform_indices = @transform_3, window_bounds = array<i64: 2, 8, 256>}]} {
    %c0_i32 = arith.constant 0 : i32
    %0 = arith.cmpi eq, %arg1, %c0_i32 : i32
    %1 = arith.extui %0 : i1 to i32
    %c0_i32_0 = arith.constant 0 : i32
    %2 = arith.cmpi ne, %1, %c0_i32_0 : i32
    scf.if %2 {
      %c2_i32 = arith.constant 2 : i32
      %228 = arith.muli %arg0, %c2_i32 : i32
      %c0_i32_39 = arith.constant 0 : i32
      %229 = arith.addi %228, %c0_i32_39 : i32
      %c0_i32_40 = arith.constant 0 : i32
      %c0_i32_41 = arith.constant 0 : i32
      %c0_i32_42 = arith.constant 0 : i32
      %c0_i32_43 = arith.constant 0 : i32
      %230 = tpu.memref_slice %arg2[%229, %c0_i32_42, %c0_i32_43] : memref<2x4x256xf32, #tpu.memory_space<any>> -> memref<1x4x256xf32, #tpu.memory_space<any>>
      %231 = tpu.memref_squeeze %230 : memref<1x4x256xf32, #tpu.memory_space<any>> -> memref<4x256xf32, #tpu.memory_space<any>>
      %c0_i32_44 = arith.constant 0 : i32
      %c128_i32 = arith.constant 128 : i32
      %232 = tpu.memref_slice %arg6[%c0_i32_40, %c0_i32_44, %c128_i32] : memref<2x4x512xf32, #tpu.memory_space<vmem>> -> memref<1x4x256xf32, #tpu.memory_space<vmem>>
      %233 = tpu.memref_squeeze %232 : memref<1x4x256xf32, #tpu.memory_space<vmem>> -> memref<4x256xf32, #tpu.memory_space<vmem>>
      %234 = tpu.memref_slice %arg7[%c0_i32_41] : memref<2x!tpu.dma_semaphore, #tpu.memory_space<semaphore_mem>> -> memref<1x!tpu.dma_semaphore, #tpu.memory_space<semaphore_mem>>
      %235 = tpu.memref_squeeze %234 : memref<1x!tpu.dma_semaphore, #tpu.memory_space<semaphore_mem>> -> memref<!tpu.dma_semaphore, #tpu.memory_space<semaphore_mem>>
      tpu.enqueue_dma source(%231 : memref<4x256xf32, #tpu.memory_space<any>>) target(%233 : memref<4x256xf32, #tpu.memory_space<vmem>>) target_semaphore(%235 : memref<!tpu.dma_semaphore, #tpu.memory_space<semaphore_mem>>)
      %c2_i32_45 = arith.constant 2 : i32
      %236 = arith.muli %arg0, %c2_i32_45 : i32
      %c1_i32_46 = arith.constant 1 : i32
      %237 = arith.addi %236, %c1_i32_46 : i32
      %c1_i32_47 = arith.constant 1 : i32
      %c1_i32_48 = arith.constant 1 : i32
      %c0_i32_49 = arith.constant 0 : i32
      %c0_i32_50 = arith.constant 0 : i32
      %238 = tpu.memref_slice %arg2[%237, %c0_i32_49, %c0_i32_50] : memref<2x4x256xf32, #tpu.memory_space<any>> -> memref<1x4x256xf32, #tpu.memory_space<any>>
      %239 = tpu.memref_squeeze %238 : memref<1x4x256xf32, #tpu.memory_space<any>> -> memref<4x256xf32, #tpu.memory_space<any>>
      %c0_i32_51 = arith.constant 0 : i32
      %c128_i32_52 = arith.constant 128 : i32
      %240 = tpu.memref_slice %arg6[%c1_i32_47, %c0_i32_51, %c128_i32_52] : memref<2x4x512xf32, #tpu.memory_space<vmem>> -> memref<1x4x256xf32, #tpu.memory_space<vmem>>
      %241 = tpu.memref_squeeze %240 : memref<1x4x256xf32, #tpu.memory_space<vmem>> -> memref<4x256xf32, #tpu.memory_space<vmem>>
      %242 = tpu.memref_slice %arg7[%c1_i32_48] : memref<2x!tpu.dma_semaphore, #tpu.memory_space<semaphore_mem>> -> memref<1x!tpu.dma_semaphore, #tpu.memory_space<semaphore_mem>>
      %243 = tpu.memref_squeeze %242 : memref<1x!tpu.dma_semaphore, #tpu.memory_space<semaphore_mem>> -> memref<!tpu.dma_semaphore, #tpu.memory_space<semaphore_mem>>
      tpu.enqueue_dma source(%239 : memref<4x256xf32, #tpu.memory_space<any>>) target(%241 : memref<4x256xf32, #tpu.memory_space<vmem>>) target_semaphore(%243 : memref<!tpu.dma_semaphore, #tpu.memory_space<semaphore_mem>>)
      %cst_53 = arith.constant 0.000000e+00 : f32
      %244 = vector.broadcast %cst_53 : f32 to vector<2x4x128xf32>
      %c0_54 = arith.constant 0 : index
      %c0_55 = arith.constant 0 : index
      %c0_56 = arith.constant 0 : index
      %245 = vector.load %arg6[%c0_54, %c0_55, %c0_56] : memref<2x4x512xf32, #tpu.memory_space<vmem>>, vector<2x4x128xf32>
      tpu.vector_store %arg6[%c0_54, %c0_55, %c0_56], %244 {strides = array<i32>} : memref<2x4x512xf32, #tpu.memory_space<vmem>>, vector<2x4x128xf32>,
      %cst_57 = arith.constant 0.000000e+00 : f32
      %246 = vector.broadcast %cst_57 : f32 to vector<2x4x128xf32>
      %c0_58 = arith.constant 0 : index
      %c0_59 = arith.constant 0 : index
      %c384 = arith.constant 384 : index
      %247 = vector.load %arg6[%c0_58, %c0_59, %c384] : memref<2x4x512xf32, #tpu.memory_space<vmem>>, vector<2x4x128xf32>
      tpu.vector_store %arg6[%c0_58, %c0_59, %c384], %246 {strides = array<i32>} : memref<2x4x512xf32, #tpu.memory_space<vmem>>, vector<2x4x128xf32>,
      %c2_i32_60 = arith.constant 2 : i32
      %248 = arith.muli %arg0, %c2_i32_60 : i32
      %c0_i32_61 = arith.constant 0 : i32
      %249 = arith.addi %248, %c0_i32_61 : i32
      %c0_i32_62 = arith.constant 0 : i32
      %c0_i32_63 = arith.constant 0 : i32
      %c0_i32_64 = arith.constant 0 : i32
      %c0_i32_65 = arith.constant 0 : i32
      %250 = tpu.memref_slice %arg2[%249, %c0_i32_64, %c0_i32_65] : memref<2x4x256xf32, #tpu.memory_space<any>> -> memref<1x4x256xf32, #tpu.memory_space<any>>
      %251 = tpu.memref_squeeze %250 : memref<1x4x256xf32, #tpu.memory_space<any>> -> memref<4x256xf32, #tpu.memory_space<any>>
      %c0_i32_66 = arith.constant 0 : i32
      %c128_i32_67 = arith.constant 128 : i32
      %252 = tpu.memref_slice %arg6[%c0_i32_62, %c0_i32_66, %c128_i32_67] : memref<2x4x512xf32, #tpu.memory_space<vmem>> -> memref<1x4x256xf32, #tpu.memory_space<vmem>>
      %253 = tpu.memref_squeeze %252 : memref<1x4x256xf32, #tpu.memory_space<vmem>> -> memref<4x256xf32, #tpu.memory_space<vmem>>
      %254 = tpu.memref_slice %arg7[%c0_i32_63] : memref<2x!tpu.dma_semaphore, #tpu.memory_space<semaphore_mem>> -> memref<1x!tpu.dma_semaphore, #tpu.memory_space<semaphore_mem>>
      %255 = tpu.memref_squeeze %254 : memref<1x!tpu.dma_semaphore, #tpu.memory_space<semaphore_mem>> -> memref<!tpu.dma_semaphore, #tpu.memory_space<semaphore_mem>>
      tpu.wait_dma2 semaphore(%255 : memref<!tpu.dma_semaphore, #tpu.memory_space<semaphore_mem>>) src(%251 : memref<4x256xf32, #tpu.memory_space<any>>) dst(%253 : memref<4x256xf32, #tpu.memory_space<vmem>>)
      %c2_i32_68 = arith.constant 2 : i32
      %256 = arith.muli %arg0, %c2_i32_68 : i32
      %c1_i32_69 = arith.constant 1 : i32
      %257 = arith.addi %256, %c1_i32_69 : i32
      %c1_i32_70 = arith.constant 1 : i32
      %c1_i32_71 = arith.constant 1 : i32
      %c0_i32_72 = arith.constant 0 : i32
      %c0_i32_73 = arith.constant 0 : i32
      %258 = tpu.memref_slice %arg2[%257, %c0_i32_72, %c0_i32_73] : memref<2x4x256xf32, #tpu.memory_space<any>> -> memref<1x4x256xf32, #tpu.memory_space<any>>
      %259 = tpu.memref_squeeze %258 : memref<1x4x256xf32, #tpu.memory_space<any>> -> memref<4x256xf32, #tpu.memory_space<any>>
      %c0_i32_74 = arith.constant 0 : i32
      %c128_i32_75 = arith.constant 128 : i32
      %260 = tpu.memref_slice %arg6[%c1_i32_70, %c0_i32_74, %c128_i32_75] : memref<2x4x512xf32, #tpu.memory_space<vmem>> -> memref<1x4x256xf32, #tpu.memory_space<vmem>>
      %261 = tpu.memref_squeeze %260 : memref<1x4x256xf32, #tpu.memory_space<vmem>> -> memref<4x256xf32, #tpu.memory_space<vmem>>
      %262 = tpu.memref_slice %arg7[%c1_i32_71] : memref<2x!tpu.dma_semaphore, #tpu.memory_space<semaphore_mem>> -> memref<1x!tpu.dma_semaphore, #tpu.memory_space<semaphore_mem>>
      %263 = tpu.memref_squeeze %262 : memref<1x!tpu.dma_semaphore, #tpu.memory_space<semaphore_mem>> -> memref<!tpu.dma_semaphore, #tpu.memory_space<semaphore_mem>>
      tpu.wait_dma2 semaphore(%263 : memref<!tpu.dma_semaphore, #tpu.memory_space<semaphore_mem>>) src(%259 : memref<4x256xf32, #tpu.memory_space<any>>) dst(%261 : memref<4x256xf32, #tpu.memory_space<vmem>>)
    } else {
    }
    %c0 = arith.constant 0 : index
    %c0_1 = arith.constant 0 : index
    %3 = vector.load %arg3[%c0, %c0_1] : memref<4x9xf32, #tpu.memory_space<vmem>>, vector<4x9xf32>
    %c0_2 = arith.constant 0 : index
    %c0_3 = arith.constant 0 : index
    %4 = vector.load %arg4[%c0_2, %c0_3] : memref<8x4xf32, #tpu.memory_space<vmem>>, vector<8x4xf32>
    %5 = tpu.iota {dimensions = array<i32: 1>} : vector<1x256xi32>
    %c16_i32 = arith.constant 16 : i32
    %c0_i32_4 = arith.constant 0 : i32
    %6 = arith.cmpi eq, %c16_i32, %c0_i32_4 : i32
    %c1_i32 = arith.constant 1 : i32
    %7 = arith.select %6, %c1_i32, %c16_i32 : i32
    %8 = vector.broadcast %7 : i32 to vector<1x256xi32>
    %9 = arith.remsi %5, %8 : vector<1x256xi32>
    %c0_i32_5 = arith.constant 0 : i32
    %10 = vector.broadcast %c0_i32_5 : i32 to vector<1x256xi32>
    %11 = arith.cmpi ne, %9, %10 : vector<1x256xi32>
    %c0_i32_6 = arith.constant 0 : i32
    %12 = vector.broadcast %c0_i32_6 : i32 to vector<1x256xi32>
    %13 = arith.cmpi slt, %9, %12 : vector<1x256xi32>
    %c0_i32_7 = arith.constant 0 : i32
    %14 = arith.cmpi slt, %7, %c0_i32_7 : i32
    %15 = vector.broadcast %14 : i1 to vector<1x256xi1>
    %16 = vector.broadcast %15 : vector<1x256xi1> to vector<1x256xi1>
    %17 = arith.xori %13, %16 : vector<1x256xi1>
    %18 = arith.andi %17, %11 : vector<1x256xi1>
    %19 = vector.broadcast %7 : i32 to vector<1x256xi32>
    %20 = arith.addi %9, %19 : vector<1x256xi32>
    %21 = arith.select %18, %20, %9 : vector<1x256xi1>, vector<1x256xi32>
    %c-1_i32 = arith.constant -1 : i32
    %22 = vector.broadcast %c-1_i32 : i32 to vector<1x256xi32>
    %23 = arith.addi %21, %22 : vector<1x256xi32>
    %c0_i32_8 = arith.constant 0 : i32
    %24 = vector.broadcast %c0_i32_8 : i32 to vector<1x256xi32>
    %25 = arith.cmpi sge, %23, %24 : vector<1x256xi32>
    %c16_i32_9 = arith.constant 16 : i32
    %26 = vector.broadcast %c16_i32_9 : i32 to vector<1x256xi32>
    %27 = arith.cmpi slt, %23, %26 : vector<1x256xi32>
    %28 = arith.andi %25, %27 : vector<1x256xi1>
    %29 = vector.shape_cast %28 : vector<1x256xi1> to vector<1x256xi1>
    %30 = vector.broadcast %29 : vector<1x256xi1> to vector<4x256xi1>
    %c1_i32_10 = arith.constant 1 : i32
    %31 = vector.broadcast %c1_i32_10 : i32 to vector<1x256xi32>
    %32 = arith.addi %21, %31 : vector<1x256xi32>
    %c0_i32_11 = arith.constant 0 : i32
    %33 = vector.broadcast %c0_i32_11 : i32 to vector<1x256xi32>
    %34 = arith.cmpi sge, %32, %33 : vector<1x256xi32>
    %c16_i32_12 = arith.constant 16 : i32
    %35 = vector.broadcast %c16_i32_12 : i32 to vector<1x256xi32>
    %36 = arith.cmpi slt, %32, %35 : vector<1x256xi32>
    %37 = arith.andi %34, %36 : vector<1x256xi1>
    %38 = vector.shape_cast %37 : vector<1x256xi1> to vector<1x256xi1>
    %39 = vector.broadcast %38 : vector<1x256xi1> to vector<4x256xi1>
    %c0_13 = arith.constant 0 : index
    %c0_14 = arith.constant 0 : index
    %c0_15 = arith.constant 0 : index
    %40 = vector.load %arg6[%c0_13, %c0_14, %c0_15] : memref<2x4x512xf32, #tpu.memory_space<vmem>>, vector<1x4x512xf32>
    %41 = vector.shape_cast %40 : vector<1x4x512xf32> to vector<4x512xf32>
    %cst = arith.constant 0.000000e+00 : f32
    %42 = vector.broadcast %cst : f32 to vector<4x256xf32>
    %43 = vector.extract_strided_slice %41 {offsets = [0, 111], sizes = [4, 256], strides = [1, 1]} : vector<4x512xf32> to vector<4x256xf32>
    %c0_i32_16 = arith.constant 0 : i32
    %44 = arith.sitofp %c0_i32_16 : i32 to f32
    %45 = vector.broadcast %44 : f32 to vector<4x256xf32>
    %46 = arith.select %30, %43, %45 : vector<4x256xi1>, vector<4x256xf32>
    %47 = vector.extract_strided_slice %3 {offsets = [0, 0], sizes = [4, 1], strides = [1, 1]} : vector<4x9xf32> to vector<4x1xf32>
    %48 = vector.broadcast %47 : vector<4x1xf32> to vector<4x256xf32>
    %49 = arith.mulf %48, %46 : vector<4x256xf32>
    %50 = arith.addf %42, %49 : vector<4x256xf32>
    %51 = vector.extract_strided_slice %41 {offsets = [0, 112], sizes = [4, 256], strides = [1, 1]} : vector<4x512xf32> to vector<4x256xf32>
    %52 = vector.extract_strided_slice %3 {offsets = [0, 1], sizes = [4, 1], strides = [1, 1]} : vector<4x9xf32> to vector<4x1xf32>
    %53 = vector.broadcast %52 : vector<4x1xf32> to vector<4x256xf32>
    %54 = arith.mulf %53, %51 : vector<4x256xf32>
    %55 = arith.addf %50, %54 : vector<4x256xf32>
    %56 = vector.extract_strided_slice %41 {offsets = [0, 113], sizes = [4, 256], strides = [1, 1]} : vector<4x512xf32> to vector<4x256xf32>
    %c0_i32_17 = arith.constant 0 : i32
    %57 = arith.sitofp %c0_i32_17 : i32 to f32
    %58 = vector.broadcast %57 : f32 to vector<4x256xf32>
    %59 = arith.select %39, %56, %58 : vector<4x256xi1>, vector<4x256xf32>
    %60 = vector.extract_strided_slice %3 {offsets = [0, 2], sizes = [4, 1], strides = [1, 1]} : vector<4x9xf32> to vector<4x1xf32>
    %61 = vector.broadcast %60 : vector<4x1xf32> to vector<4x256xf32>
    %62 = arith.mulf %61, %59 : vector<4x256xf32>
    %63 = arith.addf %55, %62 : vector<4x256xf32>
    %64 = vector.extract_strided_slice %41 {offsets = [0, 127], sizes = [4, 256], strides = [1, 1]} : vector<4x512xf32> to vector<4x256xf32>
    %c0_i32_18 = arith.constant 0 : i32
    %65 = arith.sitofp %c0_i32_18 : i32 to f32
    %66 = vector.broadcast %65 : f32 to vector<4x256xf32>
    %67 = arith.select %30, %64, %66 : vector<4x256xi1>, vector<4x256xf32>
    %68 = vector.extract_strided_slice %3 {offsets = [0, 3], sizes = [4, 1], strides = [1, 1]} : vector<4x9xf32> to vector<4x1xf32>
    %69 = vector.broadcast %68 : vector<4x1xf32> to vector<4x256xf32>
    %70 = arith.mulf %69, %67 : vector<4x256xf32>
    %71 = arith.addf %63, %70 : vector<4x256xf32>
    %72 = vector.extract_strided_slice %41 {offsets = [0, 128], sizes = [4, 256], strides = [1, 1]} : vector<4x512xf32> to vector<4x256xf32>
    %73 = vector.extract_strided_slice %3 {offsets = [0, 4], sizes = [4, 1], strides = [1, 1]} : vector<4x9xf32> to vector<4x1xf32>
    %74 = vector.broadcast %73 : vector<4x1xf32> to vector<4x256xf32>
    %75 = arith.mulf %74, %72 : vector<4x256xf32>
    %76 = arith.addf %71, %75 : vector<4x256xf32>
    %77 = vector.extract_strided_slice %41 {offsets = [0, 129], sizes = [4, 256], strides = [1, 1]} : vector<4x512xf32> to vector<4x256xf32>
    %c0_i32_19 = arith.constant 0 : i32
    %78 = arith.sitofp %c0_i32_19 : i32 to f32
    %79 = vector.broadcast %78 : f32 to vector<4x256xf32>
    %80 = arith.select %39, %77, %79 : vector<4x256xi1>, vector<4x256xf32>
    %81 = vector.extract_strided_slice %3 {offsets = [0, 5], sizes = [4, 1], strides = [1, 1]} : vector<4x9xf32> to vector<4x1xf32>
    %82 = vector.broadcast %81 : vector<4x1xf32> to vector<4x256xf32>
    %83 = arith.mulf %82, %80 : vector<4x256xf32>
    %84 = arith.addf %76, %83 : vector<4x256xf32>
    %85 = vector.extract_strided_slice %41 {offsets = [0, 143], sizes = [4, 256], strides = [1, 1]} : vector<4x512xf32> to vector<4x256xf32>
    %c0_i32_20 = arith.constant 0 : i32
    %86 = arith.sitofp %c0_i32_20 : i32 to f32
    %87 = vector.broadcast %86 : f32 to vector<4x256xf32>
    %88 = arith.select %30, %85, %87 : vector<4x256xi1>, vector<4x256xf32>
    %89 = vector.extract_strided_slice %3 {offsets = [0, 6], sizes = [4, 1], strides = [1, 1]} : vector<4x9xf32> to vector<4x1xf32>
    %90 = vector.broadcast %89 : vector<4x1xf32> to vector<4x256xf32>
    %91 = arith.mulf %90, %88 : vector<4x256xf32>
    %92 = arith.addf %84, %91 : vector<4x256xf32>
    %93 = vector.extract_strided_slice %41 {offsets = [0, 144], sizes = [4, 256], strides = [1, 1]} : vector<4x512xf32> to vector<4x256xf32>
    %94 = vector.extract_strided_slice %3 {offsets = [0, 7], sizes = [4, 1], strides = [1, 1]} : vector<4x9xf32> to vector<4x1xf32>
    %95 = vector.broadcast %94 : vector<4x1xf32> to vector<4x256xf32>
    %96 = arith.mulf %95, %93 : vector<4x256xf32>
    %97 = arith.addf %92, %96 : vector<4x256xf32>
    %98 = vector.extract_strided_slice %41 {offsets = [0, 145], sizes = [4, 256], strides = [1, 1]} : vector<4x512xf32> to vector<4x256xf32>
    %c0_i32_21 = arith.constant 0 : i32
    %99 = arith.sitofp %c0_i32_21 : i32 to f32
    %100 = vector.broadcast %99 : f32 to vector<4x256xf32>
    %101 = arith.select %39, %98, %100 : vector<4x256xi1>, vector<4x256xf32>
    %102 = vector.extract_strided_slice %3 {offsets = [0, 8], sizes = [4, 1], strides = [1, 1]} : vector<4x9xf32> to vector<4x1xf32>
    %103 = vector.broadcast %102 : vector<4x1xf32> to vector<4x256xf32>
    %104 = arith.mulf %103, %101 : vector<4x256xf32>
    %105 = arith.addf %97, %104 : vector<4x256xf32>
    %cst_22 = arith.constant 0.000000e+00 : f32
    %106 = vector.broadcast %cst_22 : f32 to vector<8x256xf32>
    %107 = vector.extract_strided_slice %4 {offsets = [0, 0], sizes = [8, 1], strides = [1, 1]} : vector<8x4xf32> to vector<8x1xf32>
    %108 = vector.extract_strided_slice %105 {offsets = [0, 0], sizes = [1, 256], strides = [1, 1]} : vector<4x256xf32> to vector<1x256xf32>
    %109 = vector.broadcast %107 : vector<8x1xf32> to vector<8x256xf32>
    %110 = vector.broadcast %108 : vector<1x256xf32> to vector<8x256xf32>
    %111 = arith.mulf %109, %110 : vector<8x256xf32>
    %112 = arith.addf %106, %111 : vector<8x256xf32>
    %113 = vector.extract_strided_slice %4 {offsets = [0, 1], sizes = [8, 1], strides = [1, 1]} : vector<8x4xf32> to vector<8x1xf32>
    %114 = vector.extract_strided_slice %105 {offsets = [1, 0], sizes = [1, 256], strides = [1, 1]} : vector<4x256xf32> to vector<1x256xf32>
    %115 = vector.broadcast %113 : vector<8x1xf32> to vector<8x256xf32>
    %116 = vector.broadcast %114 : vector<1x256xf32> to vector<8x256xf32>
    %117 = arith.mulf %115, %116 : vector<8x256xf32>
    %118 = arith.addf %112, %117 : vector<8x256xf32>
    %119 = vector.extract_strided_slice %4 {offsets = [0, 2], sizes = [8, 1], strides = [1, 1]} : vector<8x4xf32> to vector<8x1xf32>
    %120 = vector.extract_strided_slice %105 {offsets = [2, 0], sizes = [1, 256], strides = [1, 1]} : vector<4x256xf32> to vector<1x256xf32>
    %121 = vector.broadcast %119 : vector<8x1xf32> to vector<8x256xf32>
    %122 = vector.broadcast %120 : vector<1x256xf32> to vector<8x256xf32>
    %123 = arith.mulf %121, %122 : vector<8x256xf32>
    %124 = arith.addf %118, %123 : vector<8x256xf32>
    %125 = vector.extract_strided_slice %4 {offsets = [0, 3], sizes = [8, 1], strides = [1, 1]} : vector<8x4xf32> to vector<8x1xf32>
    %126 = vector.extract_strided_slice %105 {offsets = [3, 0], sizes = [1, 256], strides = [1, 1]} : vector<4x256xf32> to vector<1x256xf32>
    %127 = vector.broadcast %125 : vector<8x1xf32> to vector<8x256xf32>
    %128 = vector.broadcast %126 : vector<1x256xf32> to vector<8x256xf32>
    %129 = arith.mulf %127, %128 : vector<8x256xf32>
    %130 = arith.addf %124, %129 : vector<8x256xf32>
    %c0_23 = arith.constant 0 : index
    %c0_24 = arith.constant 0 : index
    %c0_25 = arith.constant 0 : index
    %131 = vector.load %arg5[%c0_23, %c0_24, %c0_25] : memref<2x8x256xf32, #tpu.memory_space<vmem>>, vector<1x8x256xf32>
    %132 = vector.shape_cast %131 : vector<1x8x256xf32> to vector<8x256xf32>
    %133 = vector.shape_cast %130 : vector<8x256xf32> to vector<1x8x256xf32>
    tpu.vector_store %arg5[%c0_23, %c0_24, %c0_25], %133 {strides = array<i32>} : memref<2x8x256xf32, #tpu.memory_space<vmem>>, vector<1x8x256xf32>,
    %c1 = arith.constant 1 : index
    %c0_26 = arith.constant 0 : index
    %c0_27 = arith.constant 0 : index
    %134 = vector.load %arg6[%c1, %c0_26, %c0_27] : memref<2x4x512xf32, #tpu.memory_space<vmem>>, vector<1x4x512xf32>
    %135 = vector.shape_cast %134 : vector<1x4x512xf32> to vector<4x512xf32>
    %cst_28 = arith.constant 0.000000e+00 : f32
    %136 = vector.broadcast %cst_28 : f32 to vector<4x256xf32>
    %137 = vector.extract_strided_slice %135 {offsets = [0, 111], sizes = [4, 256], strides = [1, 1]} : vector<4x512xf32> to vector<4x256xf32>
    %c0_i32_29 = arith.constant 0 : i32
    %138 = arith.sitofp %c0_i32_29 : i32 to f32
    %139 = vector.broadcast %138 : f32 to vector<4x256xf32>
    %140 = arith.select %30, %137, %139 : vector<4x256xi1>, vector<4x256xf32>
    %141 = vector.extract_strided_slice %3 {offsets = [0, 0], sizes = [4, 1], strides = [1, 1]} : vector<4x9xf32> to vector<4x1xf32>
    %142 = vector.broadcast %141 : vector<4x1xf32> to vector<4x256xf32>
    %143 = arith.mulf %142, %140 : vector<4x256xf32>
    %144 = arith.addf %136, %143 : vector<4x256xf32>
    %145 = vector.extract_strided_slice %135 {offsets = [0, 112], sizes = [4, 256], strides = [1, 1]} : vector<4x512xf32> to vector<4x256xf32>
    %146 = vector.extract_strided_slice %3 {offsets = [0, 1], sizes = [4, 1], strides = [1, 1]} : vector<4x9xf32> to vector<4x1xf32>
    %147 = vector.broadcast %146 : vector<4x1xf32> to vector<4x256xf32>
    %148 = arith.mulf %147, %145 : vector<4x256xf32>
    %149 = arith.addf %144, %148 : vector<4x256xf32>
    %150 = vector.extract_strided_slice %135 {offsets = [0, 113], sizes = [4, 256], strides = [1, 1]} : vector<4x512xf32> to vector<4x256xf32>
    %c0_i32_30 = arith.constant 0 : i32
    %151 = arith.sitofp %c0_i32_30 : i32 to f32
    %152 = vector.broadcast %151 : f32 to vector<4x256xf32>
    %153 = arith.select %39, %150, %152 : vector<4x256xi1>, vector<4x256xf32>
    %154 = vector.extract_strided_slice %3 {offsets = [0, 2], sizes = [4, 1], strides = [1, 1]} : vector<4x9xf32> to vector<4x1xf32>
    %155 = vector.broadcast %154 : vector<4x1xf32> to vector<4x256xf32>
    %156 = arith.mulf %155, %153 : vector<4x256xf32>
    %157 = arith.addf %149, %156 : vector<4x256xf32>
    %158 = vector.extract_strided_slice %135 {offsets = [0, 127], sizes = [4, 256], strides = [1, 1]} : vector<4x512xf32> to vector<4x256xf32>
    %c0_i32_31 = arith.constant 0 : i32
    %159 = arith.sitofp %c0_i32_31 : i32 to f32
    %160 = vector.broadcast %159 : f32 to vector<4x256xf32>
    %161 = arith.select %30, %158, %160 : vector<4x256xi1>, vector<4x256xf32>
    %162 = vector.extract_strided_slice %3 {offsets = [0, 3], sizes = [4, 1], strides = [1, 1]} : vector<4x9xf32> to vector<4x1xf32>
    %163 = vector.broadcast %162 : vector<4x1xf32> to vector<4x256xf32>
    %164 = arith.mulf %163, %161 : vector<4x256xf32>
    %165 = arith.addf %157, %164 : vector<4x256xf32>
    %166 = vector.extract_strided_slice %135 {offsets = [0, 128], sizes = [4, 256], strides = [1, 1]} : vector<4x512xf32> to vector<4x256xf32>
    %167 = vector.extract_strided_slice %3 {offsets = [0, 4], sizes = [4, 1], strides = [1, 1]} : vector<4x9xf32> to vector<4x1xf32>
    %168 = vector.broadcast %167 : vector<4x1xf32> to vector<4x256xf32>
    %169 = arith.mulf %168, %166 : vector<4x256xf32>
    %170 = arith.addf %165, %169 : vector<4x256xf32>
    %171 = vector.extract_strided_slice %135 {offsets = [0, 129], sizes = [4, 256], strides = [1, 1]} : vector<4x512xf32> to vector<4x256xf32>
    %c0_i32_32 = arith.constant 0 : i32
    %172 = arith.sitofp %c0_i32_32 : i32 to f32
    %173 = vector.broadcast %172 : f32 to vector<4x256xf32>
    %174 = arith.select %39, %171, %173 : vector<4x256xi1>, vector<4x256xf32>
    %175 = vector.extract_strided_slice %3 {offsets = [0, 5], sizes = [4, 1], strides = [1, 1]} : vector<4x9xf32> to vector<4x1xf32>
    %176 = vector.broadcast %175 : vector<4x1xf32> to vector<4x256xf32>
    %177 = arith.mulf %176, %174 : vector<4x256xf32>
    %178 = arith.addf %170, %177 : vector<4x256xf32>
    %179 = vector.extract_strided_slice %135 {offsets = [0, 143], sizes = [4, 256], strides = [1, 1]} : vector<4x512xf32> to vector<4x256xf32>
    %c0_i32_33 = arith.constant 0 : i32
    %180 = arith.sitofp %c0_i32_33 : i32 to f32
    %181 = vector.broadcast %180 : f32 to vector<4x256xf32>
    %182 = arith.select %30, %179, %181 : vector<4x256xi1>, vector<4x256xf32>
    %183 = vector.extract_strided_slice %3 {offsets = [0, 6], sizes = [4, 1], strides = [1, 1]} : vector<4x9xf32> to vector<4x1xf32>
    %184 = vector.broadcast %183 : vector<4x1xf32> to vector<4x256xf32>
    %185 = arith.mulf %184, %182 : vector<4x256xf32>
    %186 = arith.addf %178, %185 : vector<4x256xf32>
    %187 = vector.extract_strided_slice %135 {offsets = [0, 144], sizes = [4, 256], strides = [1, 1]} : vector<4x512xf32> to vector<4x256xf32>
    %188 = vector.extract_strided_slice %3 {offsets = [0, 7], sizes = [4, 1], strides = [1, 1]} : vector<4x9xf32> to vector<4x1xf32>
    %189 = vector.broadcast %188 : vector<4x1xf32> to vector<4x256xf32>
    %190 = arith.mulf %189, %187 : vector<4x256xf32>
    %191 = arith.addf %186, %190 : vector<4x256xf32>
    %192 = vector.extract_strided_slice %135 {offsets = [0, 145], sizes = [4, 256], strides = [1, 1]} : vector<4x512xf32> to vector<4x256xf32>
    %c0_i32_34 = arith.constant 0 : i32
    %193 = arith.sitofp %c0_i32_34 : i32 to f32
    %194 = vector.broadcast %193 : f32 to vector<4x256xf32>
    %195 = arith.select %39, %192, %194 : vector<4x256xi1>, vector<4x256xf32>
    %196 = vector.extract_strided_slice %3 {offsets = [0, 8], sizes = [4, 1], strides = [1, 1]} : vector<4x9xf32> to vector<4x1xf32>
    %197 = vector.broadcast %196 : vector<4x1xf32> to vector<4x256xf32>
    %198 = arith.mulf %197, %195 : vector<4x256xf32>
    %199 = arith.addf %191, %198 : vector<4x256xf32>
    %cst_35 = arith.constant 0.000000e+00 : f32
    %200 = vector.broadcast %cst_35 : f32 to vector<8x256xf32>
    %201 = vector.extract_strided_slice %4 {offsets = [0, 0], sizes = [8, 1], strides = [1, 1]} : vector<8x4xf32> to vector<8x1xf32>
    %202 = vector.extract_strided_slice %199 {offsets = [0, 0], sizes = [1, 256], strides = [1, 1]} : vector<4x256xf32> to vector<1x256xf32>
    %203 = vector.broadcast %201 : vector<8x1xf32> to vector<8x256xf32>
    %204 = vector.broadcast %202 : vector<1x256xf32> to vector<8x256xf32>
    %205 = arith.mulf %203, %204 : vector<8x256xf32>
    %206 = arith.addf %200, %205 : vector<8x256xf32>
    %207 = vector.extract_strided_slice %4 {offsets = [0, 1], sizes = [8, 1], strides = [1, 1]} : vector<8x4xf32> to vector<8x1xf32>
    %208 = vector.extract_strided_slice %199 {offsets = [1, 0], sizes = [1, 256], strides = [1, 1]} : vector<4x256xf32> to vector<1x256xf32>
    %209 = vector.broadcast %207 : vector<8x1xf32> to vector<8x256xf32>
    %210 = vector.broadcast %208 : vector<1x256xf32> to vector<8x256xf32>
    %211 = arith.mulf %209, %210 : vector<8x256xf32>
    %212 = arith.addf %206, %211 : vector<8x256xf32>
    %213 = vector.extract_strided_slice %4 {offsets = [0, 2], sizes = [8, 1], strides = [1, 1]} : vector<8x4xf32> to vector<8x1xf32>
    %214 = vector.extract_strided_slice %199 {offsets = [2, 0], sizes = [1, 256], strides = [1, 1]} : vector<4x256xf32> to vector<1x256xf32>
    %215 = vector.broadcast %213 : vector<8x1xf32> to vector<8x256xf32>
    %216 = vector.broadcast %214 : vector<1x256xf32> to vector<8x256xf32>
    %217 = arith.mulf %215, %216 : vector<8x256xf32>
    %218 = arith.addf %212, %217 : vector<8x256xf32>
    %219 = vector.extract_strided_slice %4 {offsets = [0, 3], sizes = [8, 1], strides = [1, 1]} : vector<8x4xf32> to vector<8x1xf32>
    %220 = vector.extract_strided_slice %199 {offsets = [3, 0], sizes = [1, 256], strides = [1, 1]} : vector<4x256xf32> to vector<1x256xf32>
    %221 = vector.broadcast %219 : vector<8x1xf32> to vector<8x256xf32>
    %222 = vector.broadcast %220 : vector<1x256xf32> to vector<8x256xf32>
    %223 = arith.mulf %221, %222 : vector<8x256xf32>
    %224 = arith.addf %218, %223 : vector<8x256xf32>
    %c1_36 = arith.constant 1 : index
    %c0_37 = arith.constant 0 : index
    %c0_38 = arith.constant 0 : index
    %225 = vector.load %arg5[%c1_36, %c0_37, %c0_38] : memref<2x8x256xf32, #tpu.memory_space<vmem>>, vector<1x8x256xf32>
    %226 = vector.shape_cast %225 : vector<1x8x256xf32> to vector<8x256xf32>
    %227 = vector.shape_cast %224 : vector<8x256xf32> to vector<1x8x256xf32>
    tpu.vector_store %arg5[%c1_36, %c0_37, %c0_38], %227 {strides = array<i32>} : memref<2x8x256xf32, #tpu.memory_space<vmem>>, vector<1x8x256xf32>,
    return
  }
  func.func @transform_1(%arg0: i32, %arg1: i32) -> (i32, i32) {
    %c0_i32 = arith.constant 0 : i32
    %c0_i32_0 = arith.constant 0 : i32
    %c0_i32_1 = arith.constant 0 : i32
    return %c0_i32, %c0_i32_0 : i32, i32
  }
  func.func @transform_2(%arg0: i32, %arg1: i32) -> (i32, i32) {
    %c0_i32 = arith.constant 0 : i32
    %c0_i32_0 = arith.constant 0 : i32
    %c0_i32_1 = arith.constant 0 : i32
    return %c0_i32, %c0_i32_0 : i32, i32
  }
  func.func @transform_3(%arg0: i32, %arg1: i32) -> (i32, i32, i32) {
    %c0_i32 = arith.constant 0 : i32
    %c0_i32_0 = arith.constant 0 : i32
    return %arg0, %c0_i32, %arg1 : i32, i32, i32
  }
}

</mosaic_0001>

<llo_original>
// kernel: tpu_custom_call.1
$region0: #{tpu_custom_call.1}
  #allocation0 [shape = 'u32[]', space=smem, size = 0x4, offset = 0x4, fixed_abs, tag = 'smem constant byte address 0x4 - core index']
  #allocation1 [shape = 'u32[144,128]{1,0:T(1,128)}', space=vmem, size = 0x12000, scoped, tag = 'internal scratch']
  #allocation2 [shape = 'f32[2,4,512]{2,1,0:T(4,128)}', space=vmem, size = 0x4000, scoped, tag = 'scratch operand']
  #allocation3 [shape = 's32[2]{0}', space=sflag, size = 0x8, scoped, tag = 'scratch operand']
  #allocation6 [shape = 's32[]', space=sflag, size = 0x4, offset = 0, fixed_abs, tag = 'sflag constant byte address 0x0 - dummy sync flag']
  #allocation7 [shape = 's32[]', space=sflag, size = 0x4, offset = 0, fixed_abs, tag = 'sflag constant byte address 0x0 - dummy sync flag']
  #allocation8 [shape = 'u32[]', space=smem, size = 0x4, offset = 0x44, fixed_abs, tag = 'smem constant byte address 0x44 - assertion arg 0']
  #allocation9 [shape = 'u32[]', space=smem, size = 0x4, offset = 0x48, fixed_abs, tag = 'smem constant byte address 0x48 - assertion arg 1']
  #allocation10 [shape = 's32[]', space=sflag, size = 0x4, offset = 0, fixed_abs, tag = 'sflag constant byte address 0x0 - dummy sync flag']
  #allocation11 [shape = 's32[]', space=sflag, size = 0x4, offset = 0, fixed_abs, tag = 'sflag constant byte address 0x0 - dummy sync flag']
  %s0 = inlined_call_operand.hbm [shape: f32[2,4,256], index: 0, kind: input, shape index: {}]
  %s1 = inlined_call_operand.vmem [shape: f32[4,9], index: 1, kind: input, shape index: {}]
  %s2 = inlined_call_operand.vmem [shape: f32[8,4], index: 2, kind: input, shape index: {}]
  %s3 = inlined_call_operand.hbm [shape: f32[2,8,256], index: 3, kind: output, shape index: {}]
  %s4 = sld [smem:[#allocation0]]
  $region30: #{tpu_custom_call.1} parent=0
    _
  %s6 = ssub.s32 1, %s4
  %s7 = scalar_select 0, %s6, %s4
  $region1: #{tpu_custom_call.1} parent=0
    #allocation4 [shape = 'u8[16384]{0}', space=vmem, size = 0x4000, scoped, tag = 'output window, operand 0, single buffered']
    #allocation5 [shape = 's32[1]{0}', space=sflag, size = 0x4, scoped, tag = 'scoped memory for tpu_custom_call.1']
    %8 = vsyncpa [#allocation5], 0
    // Predicated region
    $region2: #{tpu_custom_call.1} parent=1 // pred_check
      _
    $region3: #{tpu_custom_call.1} parent=1 // pred_check_branch
      %10 = sbr.rel (0) target = $region5
    $region4: #{tpu_custom_call.1} parent=1 // pred_region
      _
    $region5: #{tpu_custom_call.1} parent=1 // pred_fallthru
      _
    // Predicated region
    $region6: #{tpu_custom_call.1} parent=1 // pred_check
      _
    $region7: #{tpu_custom_call.1} parent=1 // pred_check_branch
      %12 = sbr.rel (0) target = $region9
    $region8: #{tpu_custom_call.1} parent=1 // pred_region
      _
    $region9: #{tpu_custom_call.1} parent=1 // pred_fallthru
      _
    %p13 = scmp.eq.s32.totalorder 0, 0
    // Predicated region
    $region10: #{tpu_custom_call.1} parent=1 // pred_check
      %p14 = pneg %p13
    $region11: #{tpu_custom_call.1} parent=1 // pred_check_branch
      %16 = sbr.rel (%p14) target = $region13
    $region12: #{tpu_custom_call.1} parent=1 // pred_region
      %s17 = smul.u32 0, 2
      %s18 = smul.u32 %s17, 2
      %s19 = smul.addr %s18, 64
      %s20 = scalar_lea.hbm %s0, %s19
      %s21 = scalar_lea.vmem [#allocation2], 4
      // Predicated region
      $region14: #{tpu_custom_call.1} parent=12 // pred_check
        _
      $region15: #{tpu_custom_call.1} parent=12 // pred_check_branch
        %23 = sbr.rel target = $region17
      $region16: #{tpu_custom_call.1} parent=12 // pred_region
        %24 = sst [smem:[#allocation8]] [#allocation7]
        %25 = sst [smem:[#allocation9]] [#allocation6]
      $region17: #{tpu_custom_call.1} parent=12 // pred_fallthru
        _
      %27 = shalt.err (0)
      %s29 = sshll.u32 %s21, 4
      %s30 = int_to_ptr.vmem [resolvable:$true] %s29
      %32 = dma.hbm_to_vmem [thread:$0]  %s20, 128, %s30, [#allocation3]
      %s33 = sadd.s32 %s17, 1
      %s34 = smul.u32 %s33, 2
      %s35 = smul.addr %s34, 64
      %s36 = scalar_lea.hbm %s0, %s35
      %s37 = scalar_lea.vmem [#allocation2], 20
      %s38 = scalar_lea.sflag [#allocation3], 1
      // Predicated region
      $region18: #{tpu_custom_call.1} parent=12 // pred_check
        _
      $region19: #{tpu_custom_call.1} parent=12 // pred_check_branch
        %40 = sbr.rel target = $region21
      $region20: #{tpu_custom_call.1} parent=12 // pred_region
        %41 = sst [smem:[#allocation8]] [#allocation11]
        %42 = sst [smem:[#allocation9]] [#allocation10]
      $region21: #{tpu_custom_call.1} parent=12 // pred_fallthru
        _
      %44 = shalt.err (0)
      %s46 = sshll.u32 %s37, 4
      %s47 = int_to_ptr.vmem [resolvable:$true] %s46
      %49 = dma.hbm_to_vmem [thread:$0]  %s36, 128, %s47, %s38
      %50 = vst [vmem:[#allocation2] sm:$0xf] 0.0
      %51 = vst [vmem:[#allocation2 + $0x10] sm:$0xf] 0.0
      %52 = vst [vmem:[#allocation2 + $0xc] sm:$0xf] 0.0
      %53 = vst [vmem:[#allocation2 + $0x1c] sm:$0xf] 0.0
      %s54 = smul.u32 4, 1
      %s55 = smul.u32 %s54, 2
      %s56 = sshll.u32 %s55, 4
      %57 = dma.done [#allocation3], %s56
      %s58 = sshll.u32 %s55, 4
      %59 = dma.done %s38, %s58
    $region13: #{tpu_custom_call.1} parent=1 // pred_fallthru
      _
    %v60 = vld [vmem:[%s1] sm:$0xf]
    %v61 = vld [vmem:[%s2] sm:$0xff]
    %v62 = vlaneseq
    %v63 = vand.u32 %v62, 127
    %v64 = vadd.s32 %v63, 128
    %vm65 = vcmp.lt.s32.totalorder %v63, 0
    %v66 = vsub.s32 0, %v63
    %v67 = vsel %vm65, %v66, %v63
    %v68 = vshrl.u32 %v67, 4
    %v69 = vand.u32 %v67, 15
    %v70 = vsub.s32 0, %v69
    %v71 = vsel %vm65, %v70, %v69
    %vm72 = vcmp.lt.s32.totalorder %v64, 0
    %v73 = vsub.s32 0, %v64
    %v74 = vsel %vm72, %v73, %v64
    %v75 = vshrl.u32 %v74, 4
    %v76 = vand.u32 %v74, 15
    %v77 = vsub.s32 0, %v76
    %v78 = vsel %vm72, %v77, %v76
    %vm79 = vcmp.ne.s32.totalorder %v71, 0
    %vm80 = vcmp.ne.s32.totalorder %v78, 0
    %vm81 = vcmp.lt.s32.totalorder %v71, 0
    %vm82 = vcmp.lt.s32.totalorder %v78, 0
    %vm83 = vmand %vm81, %vm79
    %vm84 = vmand %vm82, %vm80
    %v85 = vadd.s32 %v71, 16
    %v86 = vadd.s32 %v78, 16
    %v87 = vsel %vm83, %v85, %v71
    %v88 = vsel %vm84, %v86, %v78
    %v89 = vadd.s32 %v87, 4294967295
    %v90 = vadd.s32 %v88, 4294967295
    %vm91 = vcmp.ge.s32.totalorder %v89, 0
    %vm92 = vcmp.ge.s32.totalorder %v90, 0
    %vm93 = vcmp.lt.s32.totalorder %v89, 16
    %vm94 = vcmp.lt.s32.totalorder %v90, 16
    %vm95 = vmand %vm91, %vm93
    %vm96 = vmand %vm92, %vm94
    %v97 = vsel %vm95, 1, 0
    %v98 = vsel %vm96, 1, 0
    %vm99 = vcmp.eq.s32.totalorder %v97, 1
    %vm100 = vcmp.eq.s32.totalorder %v98, 1
    %v101 = vadd.s32 %v87, 1
    %v102 = vadd.s32 %v88, 1
    %vm103 = vcmp.ge.s32.totalorder %v101, 0
    %vm104 = vcmp.ge.s32.totalorder %v102, 0
    %vm105 = vcmp.lt.s32.totalorder %v101, 16
    %vm106 = vcmp.lt.s32.totalorder %v102, 16
    %vm107 = vmand %vm103, %vm105
    %vm108 = vmand %vm104, %vm106
    %v109 = vsel %vm107, 1, 0
    %v110 = vsel %vm108, 1, 0
    %vm111 = vcmp.eq.s32.totalorder %v109, 1
    %vm112 = vcmp.eq.s32.totalorder %v110, 1
    %v113 = vld [vmem:[#allocation2] sm:$0xff]
    %v114 = vld [vmem:[#allocation2 + $0x8] sm:$0xff]
    %v117 = vcombine.high %v113, %v113
    %118 = vrot.lane.b32.xlu0 %v113, 17
    %v119 = vpop.permute.xlu0 %118
    %120 = vrot.lane.b32.xlu0 %v117, 17
    %v121 = vpop.permute.xlu0 %120
    %122 = vrot.lane.b32.xlu0 %v114, 17
    %v123 = vpop.permute.xlu0 %122
    %vm124 = vcmask 138240
    %v125 = vsel %vm124, %v119, %v121
    %v126 = vsel %vm124, %v121, %v123
    %v129 = vsel %vm99, %v125, 0.0
    %v130 = vsel %vm100, %v126, 0.0
    %132 = vset.pattern.permute.xlu0 0
    %133 = vperm.xlu0 %132, %v60
    %v134 = vpop.permute.xlu0 %133
    %v136 = vmul.f32 %v134, %v129
    %v137 = vmul.f32 %v134, %v130
    %v138 = vadd.f32 %v136, 0.0
    %v139 = vadd.f32 %v137, 0.0
    %140 = vset.pattern.permute.xlu0 1
    %141 = vperm.xlu0 %140, %v60
    %v142 = vpop.permute.xlu0 %141
    %144 = vrot.lane.b32.xlu0 %v113, 16
    %v145 = vpop.permute.xlu0 %144
    %146 = vrot.lane.b32.xlu0 %v117, 16
    %v147 = vpop.permute.xlu0 %146
    %148 = vrot.lane.b32.xlu0 %v114, 16
    %v149 = vpop.permute.xlu0 %148
    %vm150 = vcmask 130048
    %v151 = vsel %vm150, %v145, %v147
    %v152 = vsel %vm150, %v147, %v149
    %v155 = vmul.f32 %v142, %v151
    %v156 = vmul.f32 %v142, %v152
    %v157 = vadd.f32 %v138, %v155
    %v158 = vadd.f32 %v139, %v156
    %159 = vrot.lane.b32.xlu0 %v113, 15
    %v160 = vpop.permute.xlu0 %159
    %161 = vrot.lane.b32.xlu0 %v117, 15
    %v162 = vpop.permute.xlu0 %161
    %163 = vrot.lane.b32.xlu0 %v114, 15
    %v164 = vpop.permute.xlu0 %163
    %vm165 = vcmask 121856
    %v166 = vsel %vm165, %v160, %v162
    %v167 = vsel %vm165, %v162, %v164
    %v170 = vsel %vm111, %v166, 0.0
    %v171 = vsel %vm112, %v167, 0.0
    %172 = vset.pattern.permute.xlu0 2
    %173 = vperm.xlu0 %172, %v60
    %v174 = vpop.permute.xlu0 %173
    %v176 = vmul.f32 %v174, %v170
    %v177 = vmul.f32 %v174, %v171
    %v178 = vadd.f32 %v157, %v176
    %v179 = vadd.f32 %v158, %v177
    %180 = vrot.lane.b32.xlu0 %v113, 1
    %v181 = vpop.permute.xlu0 %180
    %182 = vrot.lane.b32.xlu0 %v117, 1
    %v183 = vpop.permute.xlu0 %182
    %184 = vrot.lane.b32.xlu0 %v114, 1
    %v185 = vpop.permute.xlu0 %184
    %vm186 = vcmask 7168
    %v187 = vsel %vm186, %v181, %v183
    %v188 = vsel %vm186, %v183, %v185
    %v191 = vsel %vm99, %v187, 0.0
    %v192 = vsel %vm100, %v188, 0.0
    %193 = vset.pattern.permute.xlu0 3
    %194 = vperm.xlu0 %193, %v60
    %v195 = vpop.permute.xlu0 %194
    %v197 = vmul.f32 %v195, %v191
    %v198 = vmul.f32 %v195, %v192
    %v199 = vadd.f32 %v178, %v197
    %v200 = vadd.f32 %v179, %v198
    %201 = vset.pattern.permute.xlu0 4
    %202 = vperm.xlu0 %201, %v60
    %v203 = vpop.permute.xlu0 %202
    %v206 = vmul.f32 %v203, %v117
    %v207 = vmul.f32 %v203, %v114
    %v208 = vadd.f32 %v199, %v206
    %v209 = vadd.f32 %v200, %v207
    %v210 = vcombine.high %v114, %v114
    %211 = vrot.lane.b32.xlu0 %v117, 127
    %v212 = vpop.permute.xlu0 %211
    %213 = vrot.lane.b32.xlu0 %v114, 127
    %v214 = vpop.permute.xlu0 %213
    %215 = vrot.lane.b32.xlu0 %v210, 127
    %v216 = vpop.permute.xlu0 %215
    %vm217 = vcmask 1039360
    %v218 = vsel %vm217, %v212, %v214
    %v219 = vsel %vm217, %v214, %v216
    %v222 = vsel %vm111, %v218, 0.0
    %v223 = vsel %vm112, %v219, 0.0
    %224 = vset.pattern.permute.xlu0 5
    %225 = vperm.xlu0 %224, %v60
    %v226 = vpop.permute.xlu0 %225
    %v228 = vmul.f32 %v226, %v222
    %v229 = vmul.f32 %v226, %v223
    %v230 = vadd.f32 %v208, %v228
    %v231 = vadd.f32 %v209, %v229
    %232 = vrot.lane.b32.xlu0 %v117, 113
    %v233 = vpop.permute.xlu0 %232
    %234 = vrot.lane.b32.xlu0 %v114, 113
    %v235 = vpop.permute.xlu0 %234
    %236 = vrot.lane.b32.xlu0 %v210, 113
    %v237 = vpop.permute.xlu0 %236
    %vm238 = vcmask 924672
    %v239 = vsel %vm238, %v233, %v235
    %v240 = vsel %vm238, %v235, %v237
    %v243 = vsel %vm99, %v239, 0.0
    %v244 = vsel %vm100, %v240, 0.0
    %245 = vset.pattern.permute.xlu0 6
    %246 = vperm.xlu0 %245, %v60
    %v247 = vpop.permute.xlu0 %246
    %v249 = vmul.f32 %v247, %v243
    %v250 = vmul.f32 %v247, %v244
    %v251 = vadd.f32 %v230, %v249
    %v252 = vadd.f32 %v231, %v250
    %253 = vset.pattern.permute.xlu0 7
    %254 = vperm.xlu0 %253, %v60
    %v255 = vpop.permute.xlu0 %254
    %257 = vrot.lane.b32.xlu0 %v117, 112
    %v258 = vpop.permute.xlu0 %257
    %259 = vrot.lane.b32.xlu0 %v114, 112
    %v260 = vpop.permute.xlu0 %259
    %261 = vrot.lane.b32.xlu0 %v210, 112
    %v262 = vpop.permute.xlu0 %261
    %vm263 = vcmask 916480
    %v264 = vsel %vm263, %v258, %v260
    %v265 = vsel %vm263, %v260, %v262
    %v268 = vmul.f32 %v255, %v264
    %v269 = vmul.f32 %v255, %v265
    %v270 = vadd.f32 %v251, %v268
    %v271 = vadd.f32 %v252, %v269
    %272 = vrot.lane.b32.xlu0 %v117, 111
    %v273 = vpop.permute.xlu0 %272
    %274 = vrot.lane.b32.xlu0 %v114, 111
    %v275 = vpop.permute.xlu0 %274
    %276 = vrot.lane.b32.xlu0 %v210, 111
    %v277 = vpop.permute.xlu0 %276
    %vm278 = vcmask 908288
    %v279 = vsel %vm278, %v273, %v275
    %v280 = vsel %vm278, %v275, %v277
    %v283 = vsel %vm111, %v279, 0.0
    %v284 = vsel %vm112, %v280, 0.0
    %285 = vset.pattern.permute.xlu0 8
    %286 = vperm.xlu0 %285, %v60
    %v287 = vpop.permute.xlu0 %286
    %v289 = vmul.f32 %v287, %v283
    %v290 = vmul.f32 %v287, %v284
    %v291 = vadd.f32 %v270, %v289
    %v292 = vadd.f32 %v271, %v290
    %294 = vset.pattern.permute.xlu0 0
    %295 = vperm.xlu0 %294, %v61
    %v296 = vpop.permute.xlu0 %295
    %v298 = vlaneseq
    %v299 = vshrl.u32 %v298, 7
    %v300 = vsub.s32 0, %v299
    %v301 = vrot.slane %v291, %v300
    %v302 = vlaneseq
    %v303 = vshrl.u32 %v302, 7
    %v304 = vsub.s32 0, %v303
    %v305 = vrot.slane %v292, %v304
    %v306 = vmul.f32 %v296, %v301
    %v307 = vmul.f32 %v296, %v305
    %v308 = vadd.f32 %v306, 0.0
    %v309 = vadd.f32 %v307, 0.0
    %310 = vset.pattern.permute.xlu0 1
    %311 = vperm.xlu0 %310, %v61
    %v312 = vpop.permute.xlu0 %311
    %v314 = vlaneseq
    %v315 = vshrl.u32 %v314, 7
    %v316 = vsub.s32 1, %v315
    %v317 = vrot.slane %v291, %v316
    %v318 = vlaneseq
    %v319 = vshrl.u32 %v318, 7
    %v320 = vsub.s32 1, %v319
    %v321 = vrot.slane %v292, %v320
    %v322 = vmul.f32 %v312, %v317
    %v323 = vmul.f32 %v312, %v321
    %v324 = vadd.f32 %v308, %v322
    %v325 = vadd.f32 %v309, %v323
    %326 = vset.pattern.permute.xlu0 2
    %327 = vperm.xlu0 %326, %v61
    %v328 = vpop.permute.xlu0 %327
    %v330 = vlaneseq
    %v331 = vshrl.u32 %v330, 7
    %v332 = vsub.s32 2, %v331
    %v333 = vrot.slane %v291, %v332
    %v334 = vlaneseq
    %v335 = vshrl.u32 %v334, 7
    %v336 = vsub.s32 2, %v335
    %v337 = vrot.slane %v292, %v336
    %v338 = vmul.f32 %v328, %v333
    %v339 = vmul.f32 %v328, %v337
    %v340 = vadd.f32 %v324, %v338
    %v341 = vadd.f32 %v325, %v339
    %342 = vset.pattern.permute.xlu0 3
    %343 = vperm.xlu0 %342, %v61
    %v344 = vpop.permute.xlu0 %343
    %v346 = vlaneseq
    %v347 = vshrl.u32 %v346, 7
    %v348 = vsub.s32 3, %v347
    %v349 = vrot.slane %v291, %v348
    %v350 = vlaneseq
    %v351 = vshrl.u32 %v350, 7
    %v352 = vsub.s32 3, %v351
    %v353 = vrot.slane %v292, %v352
    %v354 = vmul.f32 %v344, %v349
    %v355 = vmul.f32 %v344, %v353
    %v356 = vadd.f32 %v340, %v354
    %v357 = vadd.f32 %v341, %v355
    %358 = vst [vmem:[#allocation4] sm:$0xff] %v356
    %359 = vst [vmem:[#allocation4 + $0x8] sm:$0xff] %v357
    %s360 = scalar_lea.vmem [#allocation2], 16
    %v361 = vld [vmem:[%s360] sm:$0xff]
    %v362 = vld [vmem:[%s360 + $0x8] sm:$0xff]
    %v365 = vcombine.high %v361, %v361
    %366 = vrot.lane.b32.xlu0 %v361, 17
    %v367 = vpop.permute.xlu0 %366
    %368 = vrot.lane.b32.xlu0 %v365, 17
    %v369 = vpop.permute.xlu0 %368
    %370 = vrot.lane.b32.xlu0 %v362, 17
    %v371 = vpop.permute.xlu0 %370
    %v372 = vsel %vm124, %v367, %v369
    %v373 = vsel %vm124, %v369, %v371
    %v376 = vsel %vm99, %v372, 0.0
    %v377 = vsel %vm100, %v373, 0.0
    %v378 = vmul.f32 %v134, %v376
    %v379 = vmul.f32 %v134, %v377
    %v380 = vadd.f32 %v378, 0.0
    %v381 = vadd.f32 %v379, 0.0
    %382 = vrot.lane.b32.xlu0 %v361, 16
    %v383 = vpop.permute.xlu0 %382
    %384 = vrot.lane.b32.xlu0 %v365, 16
    %v385 = vpop.permute.xlu0 %384
    %386 = vrot.lane.b32.xlu0 %v362, 16
    %v387 = vpop.permute.xlu0 %386
    %v388 = vsel %vm150, %v383, %v385
    %v389 = vsel %vm150, %v385, %v387
    %v392 = vmul.f32 %v142, %v388
    %v393 = vmul.f32 %v142, %v389
    %v394 = vadd.f32 %v380, %v392
    %v395 = vadd.f32 %v381, %v393
    %396 = vrot.lane.b32.xlu0 %v361, 15
    %v397 = vpop.permute.xlu0 %396
    %398 = vrot.lane.b32.xlu0 %v365, 15
    %v399 = vpop.permute.xlu0 %398
    %400 = vrot.lane.b32.xlu0 %v362, 15
    %v401 = vpop.permute.xlu0 %400
    %v402 = vsel %vm165, %v397, %v399
    %v403 = vsel %vm165, %v399, %v401
    %v406 = vsel %vm111, %v402, 0.0
    %v407 = vsel %vm112, %v403, 0.0
    %v408 = vmul.f32 %v174, %v406
    %v409 = vmul.f32 %v174, %v407
    %v410 = vadd.f32 %v394, %v408
    %v411 = vadd.f32 %v395, %v409
    %412 = vrot.lane.b32.xlu0 %v361, 1
    %v413 = vpop.permute.xlu0 %412
    %414 = vrot.lane.b32.xlu0 %v365, 1
    %v415 = vpop.permute.xlu0 %414
    %416 = vrot.lane.b32.xlu0 %v362, 1
    %v417 = vpop.permute.xlu0 %416
    %v418 = vsel %vm186, %v413, %v415
    %v419 = vsel %vm186, %v415, %v417
    %v422 = vsel %vm99, %v418, 0.0
    %v423 = vsel %vm100, %v419, 0.0
    %v424 = vmul.f32 %v195, %v422
    %v425 = vmul.f32 %v195, %v423
    %v426 = vadd.f32 %v410, %v424
    %v427 = vadd.f32 %v411, %v425
    %v429 = vmul.f32 %v203, %v365
    %v430 = vmul.f32 %v203, %v362
    %v431 = vadd.f32 %v426, %v429
    %v432 = vadd.f32 %v427, %v430
    %v433 = vcombine.high %v362, %v362
    %434 = vrot.lane.b32.xlu0 %v365, 127
    %v435 = vpop.permute.xlu0 %434
    %436 = vrot.lane.b32.xlu0 %v362, 127
    %v437 = vpop.permute.xlu0 %436
    %438 = vrot.lane.b32.xlu0 %v433, 127
    %v439 = vpop.permute.xlu0 %438
    %v440 = vsel %vm217, %v435, %v437
    %v441 = vsel %vm217, %v437, %v439
    %v444 = vsel %vm111, %v440, 0.0
    %v445 = vsel %vm112, %v441, 0.0
    %v446 = vmul.f32 %v226, %v444
    %v447 = vmul.f32 %v226, %v445
    %v448 = vadd.f32 %v431, %v446
    %v449 = vadd.f32 %v432, %v447
    %450 = vrot.lane.b32.xlu0 %v365, 113
    %v451 = vpop.permute.xlu0 %450
    %452 = vrot.lane.b32.xlu0 %v362, 113
    %v453 = vpop.permute.xlu0 %452
    %454 = vrot.lane.b32.xlu0 %v433, 113
    %v455 = vpop.permute.xlu0 %454
    %v456 = vsel %vm238, %v451, %v453
    %v457 = vsel %vm238, %v453, %v455
    %v460 = vsel %vm99, %v456, 0.0
    %v461 = vsel %vm100, %v457, 0.0
    %v462 = vmul.f32 %v247, %v460
    %v463 = vmul.f32 %v247, %v461
    %v464 = vadd.f32 %v448, %v462
    %v465 = vadd.f32 %v449, %v463
    %466 = vrot.lane.b32.xlu0 %v365, 112
    %v467 = vpop.permute.xlu0 %466
    %468 = vrot.lane.b32.xlu0 %v362, 112
    %v469 = vpop.permute.xlu0 %468
    %470 = vrot.lane.b32.xlu0 %v433, 112
    %v471 = vpop.permute.xlu0 %470
    %v472 = vsel %vm263, %v467, %v469
    %v473 = vsel %vm263, %v469, %v471
    %v476 = vmul.f32 %v255, %v472
    %v477 = vmul.f32 %v255, %v473
    %v478 = vadd.f32 %v464, %v476
    %v479 = vadd.f32 %v465, %v477
    %480 = vrot.lane.b32.xlu0 %v365, 111
    %v481 = vpop.permute.xlu0 %480
    %482 = vrot.lane.b32.xlu0 %v362, 111
    %v483 = vpop.permute.xlu0 %482
    %484 = vrot.lane.b32.xlu0 %v433, 111
    %v485 = vpop.permute.xlu0 %484
    %v486 = vsel %vm278, %v481, %v483
    %v487 = vsel %vm278, %v483, %v485
    %v490 = vsel %vm111, %v486, 0.0
    %v491 = vsel %vm112, %v487, 0.0
    %v492 = vmul.f32 %v287, %v490
    %v493 = vmul.f32 %v287, %v491
    %v494 = vadd.f32 %v478, %v492
    %v495 = vadd.f32 %v479, %v493
    %v496 = vlaneseq
    %v497 = vshrl.u32 %v496, 7
    %v498 = vsub.s32 0, %v497
    %v499 = vrot.slane %v494, %v498
    %v500 = vlaneseq
    %v501 = vshrl.u32 %v500, 7
    %v502 = vsub.s32 0, %v501
    %v503 = vrot.slane %v495, %v502
    %v504 = vmul.f32 %v296, %v499
    %v505 = vmul.f32 %v296, %v503
    %v506 = vadd.f32 %v504, 0.0
    %v507 = vadd.f32 %v505, 0.0
    %v508 = vlaneseq
    %v509 = vshrl.u32 %v508, 7
    %v510 = vsub.s32 1, %v509
    %v511 = vrot.slane %v494, %v510
    %v512 = vlaneseq
    %v513 = vshrl.u32 %v512, 7
    %v514 = vsub.s32 1, %v513
    %v515 = vrot.slane %v495, %v514
    %v516 = vmul.f32 %v312, %v511
    %v517 = vmul.f32 %v312, %v515
    %v518 = vadd.f32 %v506, %v516
    %v519 = vadd.f32 %v507, %v517
    %v520 = vlaneseq
    %v521 = vshrl.u32 %v520, 7
    %v522 = vsub.s32 2, %v521
    %v523 = vrot.slane %v494, %v522
    %v524 = vlaneseq
    %v525 = vshrl.u32 %v524, 7
    %v526 = vsub.s32 2, %v525
    %v527 = vrot.slane %v495, %v526
    %v528 = vmul.f32 %v328, %v523
    %v529 = vmul.f32 %v328, %v527
    %v530 = vadd.f32 %v518, %v528
    %v531 = vadd.f32 %v519, %v529
    %v532 = vlaneseq
    %v533 = vshrl.u32 %v532, 7
    %v534 = vsub.s32 3, %v533
    %v535 = vrot.slane %v494, %v534
    %v536 = vlaneseq
    %v537 = vshrl.u32 %v536, 7
    %v538 = vsub.s32 3, %v537
    %v539 = vrot.slane %v495, %v538
    %v540 = vmul.f32 %v344, %v535
    %v541 = vmul.f32 %v344, %v539
    %v542 = vadd.f32 %v530, %v540
    %v543 = vadd.f32 %v531, %v541
    %s544 = scalar_lea.vmem [#allocation4], 16
    %545 = vst [vmem:[%s544] sm:$0xff] %v542
    %546 = vst [vmem:[%s544 + $0x8] sm:$0xff] %v543
    // Predicated region
    $region22: #{tpu_custom_call.1} parent=1 // pred_check
      _
    $region23: #{tpu_custom_call.1} parent=1 // pred_check_branch
      %548 = sbr.rel (0) target = $region25
    $region24: #{tpu_custom_call.1} parent=1 // pred_region
      %s550 = ssub.s32 512, 512
      %551 = vsyncadd [#allocation5], %s550
      %s552 = sshll.u32 [#allocation4], 4
      %s553 = int_to_ptr.vmem [resolvable:$true] %s552
      %558 = dma.vmem_to_hbm [thread:$0]  %s553, 512, %s3, [#allocation5], 256, 256, 16
    $region25: #{tpu_custom_call.1} parent=1 // pred_fallthru
      _
    // Predicated region
    $region26: #{tpu_custom_call.1} parent=1 // pred_check
      _
    $region27: #{tpu_custom_call.1} parent=1 // pred_check_branch
      %560 = sbr.rel (0) target = $region29
    $region28: #{tpu_custom_call.1} parent=1 // pred_region
      %561 = dma.done [#allocation5], 512
    $region29: #{tpu_custom_call.1} parent=1 // pred_fallthru
      _
    %562 = vsyncpa [#allocation5], 1
  %563 = vsyncmov [#allocation3]
  %s564 = vpop.sfrf %563
  %p565 = scmp.eq.s32.totalorder %s564, 0
  %p566 = pneg %p565
  %568 = shalt.err (%p566)
  %s569 = scalar_lea.sflag [#allocation3], 1
  %570 = vsyncmov %s569
  %s571 = vpop.sfrf %570
  %p572 = scmp.eq.s32.totalorder %s571, 0
  %p573 = pneg %p572
  %575 = shalt.err (%p573)

</llo_original>
